<compile_context>
chip_gen: v5e
topology: v5e:2x2
jax: 0.10.0
libtpu: 0.0.40
codegen_flags: <defaults>
</compile_context>

<pallas_src>
import functools

import jax
import jax.numpy as jnp
from jax.experimental import pallas as pl
from jax.experimental.pallas import tpu as pltpu

EPS = 1e-6


def _round_up(n, m):
    return (n + m - 1) // m * m


def _cdiv(a, b):
    return -(-a // b)


def ffn_kernel(x_ref, w1_ref, b1_ref, w2_ref, b2_ref, gamma_ref, beta_ref,
               o_ref, acc_ref, *, d_valid, mask_lanes):
    """Grid = (row tiles, d_hid chunks).

    Per (i, k): acc += relu(x_i @ w1[:, k] + b1[k]) @ w2[k, :]
    On the last k: y = acc + b2; z = y + x (dropout eval = identity);
                   o = LayerNorm(z) over the real d_valid features.
    Feature/hidden padding is zero-filled, so padded hidden units contribute
    relu(0)*0 = 0 and padded feature lanes of z are exactly 0.
    """
    k = pl.program_id(1)

    @pl.when(k == 0)
    def _():
        acc_ref[...] = jnp.zeros_like(acc_ref)

    x = x_ref[...]                                               # (tm, d_in_p)

    # w_1 column chunk -> (tm, tk) hidden activations, f32 MXU accumulation.
    h = jnp.dot(x.astype(w1_ref.dtype), w1_ref[...],
                preferred_element_type=jnp.float32)
    h = jnp.maximum(h + b1_ref[...].astype(jnp.float32), 0.0)    # bias + ReLU

    # w_2 row chunk -> accumulate partial output into the f32 scratch.
    acc_ref[...] += jnp.dot(h.astype(w2_ref.dtype), w2_ref[...],
                            preferred_element_type=jnp.float32)

    @pl.when(k == pl.num_programs(1) - 1)
    def _():
        y = acc_ref[...] + b2_ref[...].astype(jnp.float32)
        # dropout (eval-mode identity) + residual, f32 epilogue.
        z = y + x.astype(jnp.float32)                            # (tm, d_in_p)

        # LayerNorm over the real feature count, eps=1e-6, biased variance,
        # two-pass form for numerical robustness.
        inv_n = jnp.float32(1.0 / d_valid)
        mean = jnp.sum(z, axis=-1, keepdims=True) * inv_n
        diff = z - mean
        if mask_lanes:  # static: only emitted when d_in is not a 128-multiple
            lane = jax.lax.broadcasted_iota(jnp.int32, z.shape, 1)
            diff = jnp.where(lane < d_valid, diff, 0.0)
        var = jnp.sum(diff * diff, axis=-1, keepdims=True) * inv_n
        zn = diff * jax.lax.rsqrt(var + EPS)
        o_ref[...] = (zn * gamma_ref[...].astype(jnp.float32)
                      + beta_ref[...].astype(jnp.float32)).astype(o_ref.dtype)


def positionwise_ffn(x, w1, b1, w2, b2, gamma, beta, *, tm=256, tk=512,
                     matmul_dtype=None, vmem_budget_bytes=28 * 1024 * 1024):
    """x: (B, S, d_in). w1: (d_in, d_hid) [already transposed from PyTorch
    (d_hid, d_in)], b1: (d_hid,), w2: (d_hid, d_in), b2: (d_in,),
    gamma/beta: (d_in,).  matmul_dtype (e.g. jnp.bfloat16) optionally casts the
    weight/activation operands of the two matmuls (f32 accumulation is kept)."""
    B, S, d_in = x.shape
    d_hid = w1.shape[1]
    M = B * S

    # Lane-dense feature dim; hidden dim padded to a multiple of the chunk size.
    d_in_p = _round_up(d_in, 128)
    d_hid_128 = _round_up(d_hid, 128)

    # Row tile: multiple of the sublane pack (16 for bf16, 8 for f32).
    sub = 16 if x.dtype == jnp.bfloat16 else 8
    tm_eff = max(sub, min(tm, _round_up(M, sub)))
    # Keep >=2 row-grid steps when possible so both v7x TensorCores get work
    # (the row axis is marked "parallel").
    if _cdiv(M, tm_eff) < 2 and M > sub:
        tm_eff = max(sub, _round_up(_cdiv(M, 2), sub))

    tk_eff = min(tk, d_hid_128)

    w_dt = jnp.dtype(matmul_dtype) if matmul_dtype is not None else jnp.dtype(w1.dtype)
    w_bytes = w_dt.itemsize
    x_bytes = jnp.dtype(x.dtype).itemsize

    def vmem_estimate(tm_e, tk_e):
        est = 0
        est += 2 * tm_e * d_in_p * x_bytes        # x row tile   (double buffered)
        est += 2 * tm_e * d_in_p * x_bytes        # output tile  (double buffered)
        est += 2 * d_in_p * tk_e * w_bytes        # w1 column chunk
        est += 2 * tk_e * d_in_p * w_bytes        # w2 row chunk
        est += 2 * tk_e * w_bytes                 # b1 chunk
        est += 3 * 2 * d_in_p * w_bytes           # b2 / gamma / beta
        est += tm_e * d_in_p * 4                  # f32 accumulator scratch
        est += tm_e * tk_e * 4                    # f32 hidden-chunk intermediate
        return est

    # Auto-shrink tiles to stay inside a conservative VMEM budget (fits v7x 64 MiB/TC).
    while vmem_estimate(tm_eff, tk_eff) > vmem_budget_bytes and tk_eff > 128:
        tk_eff = max(128, tk_eff // 2)
    while vmem_estimate(tm_eff, tk_eff) > vmem_budget_bytes and tm_eff > sub:
        tm_eff = max(sub, _round_up(tm_eff // 2, sub))

    d_hid_p = _round_up(d_hid_128, tk_eff)

    # VMEM limit: actual footprint + headroom, never the full v7x 64 MiB/TC.
    vmem_limit = int(min(max(vmem_estimate(tm_eff, tk_eff) * 3 // 2 + (4 << 20),
                             32 << 20), 48 << 20))

    # Parameter padding only when required (in a real model, hoist this to init so
    # no per-call pad/copy HLOs are emitted).  Zero padding is numerically inert.
    w1_p = w1.astype(w_dt)
    w2_p = w2.astype(w_dt)
    if d_in_p != d_in or d_hid_p != d_hid:
        w1_p = jnp.pad(w1_p, ((0, d_in_p - d_in), (0, d_hid_p - d_hid)))
        w2_p = jnp.pad(w2_p, ((0, d_hid_p - d_hid), (0, d_in_p - d_in)))
    b1_p = (jnp.pad(b1, (0, d_hid_p - d_hid)) if d_hid_p != d_hid else b1).reshape(1, d_hid_p)
    b2_p = (jnp.pad(b2, (0, d_in_p - d_in)) if d_in_p != d_in else b2).reshape(1, d_in_p)
    g_p = (jnp.pad(gamma, (0, d_in_p - d_in)) if d_in_p != d_in else gamma).reshape(1, d_in_p)
    be_p = (jnp.pad(beta, (0, d_in_p - d_in)) if d_in_p != d_in else beta).reshape(1, d_in_p)

    # No row padding: ragged last row tile is handled by Pallas (masked stores;
    # all math is row-wise independent).
    x2 = x.reshape(M, d_in)
    if d_in_p != d_in:
        x2 = jnp.pad(x2, ((0, 0), (0, d_in_p - d_in)))

    grid = (pl.cdiv(M, tm_eff), d_hid_p // tk_eff)
    kernel = functools.partial(ffn_kernel, d_valid=d_in,
                               mask_lanes=(d_in_p != d_in))

    out = pl.pallas_call(
        kernel,
        out_shape=jax.ShapeDtypeStruct((M, d_in_p), x.dtype),
        grid_spec=pltpu.PrefetchScalarGridSpec(
            num_scalar_prefetch=0,
            grid=grid,
            in_specs=[
                pl.BlockSpec((tm_eff, d_in_p), lambda i, k: (i, 0)),   # x (resident in k)
                pl.BlockSpec((d_in_p, tk_eff), lambda i, k: (0, k)),   # w1 column chunk
                pl.BlockSpec((1, tk_eff), lambda i, k: (0, k)),        # b1 chunk
                pl.BlockSpec((tk_eff, d_in_p), lambda i, k: (k, 0)),   # w2 row chunk
                pl.BlockSpec((1, d_in_p), lambda i, k: (0, 0)),        # b2
                pl.BlockSpec((1, d_in_p), lambda i, k: (0, 0)),        # gamma
                pl.BlockSpec((1, d_in_p), lambda i, k: (0, 0)),        # beta
            ],
            out_specs=pl.BlockSpec((tm_eff, d_in_p), lambda i, k: (i, 0)),
            scratch_shapes=[pltpu.VMEM((tm_eff, d_in_p), jnp.float32)],
        ),
        compiler_params=pltpu.CompilerParams(
            dimension_semantics=("parallel", "arbitrary"),
            vmem_limit_bytes=vmem_limit,
        ),
    )(x2, w1_p, b1_p, w2_p, b2_p, g_p, be_p)

    if d_in_p != d_in:
        out = out[:, :d_in]
    return out.reshape(B, S, d_in)


def reference_ffn(x, w1, b1, w2, b2, gamma, beta):
    """Pure-JAX reference for correctness checking."""
    h = jnp.maximum(x @ w1 + b1, 0.0)
    y = h @ w2 + b2
    z = y + x
    mean = jnp.mean(z, axis=-1, keepdims=True)
    var = jnp.mean((z - mean) ** 2, axis=-1, keepdims=True)
    return (z - mean) / jnp.sqrt(var + EPS) * gamma + beta


if __name__ == "__main__":
    # Small, PyTorch-consistent shapes: batch=2, seq=8, d_in=32, d_hid=64
    B, S, d_in, d_hid = 2, 8, 32, 64

    key = jax.random.PRNGKey(0)
    kx, k1, kb1, k2, kb2 = jax.random.split(key, 5)

    x = jax.random.normal(kx, (B, S, d_in), dtype=jnp.float32)

    # Deterministic parameter init (uniform, PyTorch-Linear-style fan-in bound).
    bound1 = 1.0 / (d_in ** 0.5)
    bound2 = 1.0 / (d_hid ** 0.5)
    w1 = jax.random.uniform(k1, (d_in, d_hid), jnp.float32, -bound1, bound1)
    b1 = jax.random.uniform(kb1, (d_hid,), jnp.float32, -bound1, bound1)
    w2 = jax.random.uniform(k2, (d_hid, d_in), jnp.float32, -bound2, bound2)
    b2 = jax.random.uniform(kb2, (d_in,), jnp.float32, -bound2, bound2)
    gamma = jnp.ones((d_in,), jnp.float32)
    beta = jnp.zeros((d_in,), jnp.float32)

    out = positionwise_ffn(x, w1, b1, w2, b2, gamma, beta)
    out = jax.block_until_ready(out)

    ref = reference_ffn(x, w1, b1, w2, b2, gamma, beta)
    assert out.shape == (B, S, d_in)
    assert jnp.allclose(out, ref, atol=2e-5, rtol=2e-5), "mismatch vs reference"

    print("KERNEL_OK")
</pallas_src>

<mosaic_0001>
module attributes {stable_mosaic.version = 11 : i64} {
  func.func @ffn_kernel(%arg0: i32, %arg1: i32, %arg2: memref<8x128xf32, #tpu.memory_space<vmem>>, %arg3: memref<128x128xf32, #tpu.memory_space<vmem>>, %arg4: memref<1x128xf32, #tpu.memory_space<vmem>>, %arg5: memref<128x128xf32, #tpu.memory_space<vmem>>, %arg6: memref<1x128xf32, #tpu.memory_space<vmem>>, %arg7: memref<1x128xf32, #tpu.memory_space<vmem>>, %arg8: memref<1x128xf32, #tpu.memory_space<vmem>>, %arg9: memref<8x128xf32, #tpu.memory_space<vmem>>, %arg10: memref<8x128xf32, #tpu.memory_space<vmem>>) attributes {dimension_semantics = [#tpu.dimension_semantics<parallel>, #tpu.dimension_semantics<arbitrary>], iteration_bounds = array<i64: 2, 1>, scalar_prefetch = 0 : i64, scratch_operands = 1 : i64, tpu.core_type = #tpu.core_type<tc>, window_params = [{transform_indices = @transform_0, window_bounds = array<i64: 8, 128>}, {transform_indices = @transform_1, window_bounds = array<i64: 128, 128>}, {transform_indices = @transform_2, window_bounds = array<i64: 1, 128>}, {transform_indices = @transform_3, window_bounds = array<i64: 128, 128>}, {pipeline_mode = #tpu.pipeline_mode<synchronous>, transform_indices = @transform_4, window_bounds = array<i64: 1, 128>}, {pipeline_mode = #tpu.pipeline_mode<synchronous>, transform_indices = @transform_5, window_bounds = array<i64: 1, 128>}, {pipeline_mode = #tpu.pipeline_mode<synchronous>, transform_indices = @transform_6, window_bounds = array<i64: 1, 128>}, {transform_indices = @transform_7, window_bounds = array<i64: 8, 128>}]} {
    %c0_i32 = arith.constant 0 : i32
    %0 = arith.cmpi eq, %arg1, %c0_i32 : i32
    %1 = arith.extui %0 : i1 to i32
    %c0_i32_0 = arith.constant 0 : i32
    %2 = arith.cmpi ne, %1, %c0_i32_0 : i32
    scf.if %2 {
      %cst_16 = arith.constant 0.000000e+00 : f32
      %19 = vector.broadcast %cst_16 : f32 to vector<8x128xf32>
      %c0_17 = arith.constant 0 : index
      %c0_18 = arith.constant 0 : index
      %20 = vector.load %arg10[%c0_17, %c0_18] : memref<8x128xf32, #tpu.memory_space<vmem>>, vector<8x128xf32>
      tpu.vector_store %arg10[%c0_17, %c0_18], %19 {strides = array<i32>} : memref<8x128xf32, #tpu.memory_space<vmem>>, vector<8x128xf32>,
    } else {
    }
    %c0 = arith.constant 0 : index
    %c0_1 = arith.constant 0 : index
    %3 = vector.load %arg2[%c0, %c0_1] : memref<8x128xf32, #tpu.memory_space<vmem>>, vector<8x128xf32>
    %c0_2 = arith.constant 0 : index
    %c0_3 = arith.constant 0 : index
    %4 = vector.load %arg3[%c0_2, %c0_3] : memref<128x128xf32, #tpu.memory_space<vmem>>, vector<128x128xf32>
    %cst = arith.constant dense<0.000000e+00> : vector<8x128xf32>
    %5 = tpu.matmul %3, %4, %cst {dimension_numbers = #tpu.dot_dimension_numbers<[1], [0], [0], [1], [0, 0, 1, 1], [], []>} : vector<8x128xf32>, vector<128x128xf32>, vector<8x128xf32> -> vector<8x128xf32>
    %c0_4 = arith.constant 0 : index
    %c0_5 = arith.constant 0 : index
    %6 = vector.load %arg4[%c0_4, %c0_5] : memref<1x128xf32, #tpu.memory_space<vmem>>, vector<1x128xf32>
    %7 = vector.broadcast %6 : vector<1x128xf32> to vector<8x128xf32>
    %8 = arith.addf %5, %7 : vector<8x128xf32>
    %cst_6 = arith.constant 0.000000e+00 : f32
    %9 = vector.broadcast %cst_6 : f32 to vector<8x128xf32>
    %10 = arith.maximumf %8, %9 : vector<8x128xf32>
    %c0_7 = arith.constant 0 : index
    %c0_8 = arith.constant 0 : index
    %11 = vector.load %arg10[%c0_7, %c0_8] : memref<8x128xf32, #tpu.memory_space<vmem>>, vector<8x128xf32>
    %c0_9 = arith.constant 0 : index
    %c0_10 = arith.constant 0 : index
    %12 = vector.load %arg5[%c0_9, %c0_10] : memref<128x128xf32, #tpu.memory_space<vmem>>, vector<128x128xf32>
    %cst_11 = arith.constant dense<0.000000e+00> : vector<8x128xf32>
    %13 = tpu.matmul %10, %12, %cst_11 {dimension_numbers = #tpu.dot_dimension_numbers<[1], [0], [0], [1], [0, 0, 1, 1], [], []>} : vector<8x128xf32>, vector<128x128xf32>, vector<8x128xf32> -> vector<8x128xf32>
    %14 = arith.addf %11, %13 : vector<8x128xf32>
    %c0_12 = arith.constant 0 : index
    %c0_13 = arith.constant 0 : index
    %15 = vector.load %arg10[%c0_12, %c0_13] : memref<8x128xf32, #tpu.memory_space<vmem>>, vector<8x128xf32>
    tpu.vector_store %arg10[%c0_12, %c0_13], %14 {strides = array<i32>} : memref<8x128xf32, #tpu.memory_space<vmem>>, vector<8x128xf32>,
    %c0_i32_14 = arith.constant 0 : i32
    %16 = arith.cmpi eq, %arg1, %c0_i32_14 : i32
    %17 = arith.extui %16 : i1 to i32
    %c0_i32_15 = arith.constant 0 : i32
    %18 = arith.cmpi ne, %17, %c0_i32_15 : i32
    scf.if %18 {
      %c0_16 = arith.constant 0 : index
      %c0_17 = arith.constant 0 : index
      %19 = vector.load %arg10[%c0_16, %c0_17] : memref<8x128xf32, #tpu.memory_space<vmem>>, vector<8x128xf32>
      %c0_18 = arith.constant 0 : index
      %c0_19 = arith.constant 0 : index
      %20 = vector.load %arg6[%c0_18, %c0_19] : memref<1x128xf32, #tpu.memory_space<vmem>>, vector<1x128xf32>
      %21 = vector.broadcast %20 : vector<1x128xf32> to vector<8x128xf32>
      %22 = arith.addf %19, %21 : vector<8x128xf32>
      %23 = arith.addf %22, %3 : vector<8x128xf32>
      %cst_20 = arith.constant dense<0.000000e+00> : vector<8xf32>
      %24 = vector.multi_reduction <add>, %23, %cst_20 [1] : vector<8x128xf32> to vector<8xf32>
      %25 = vector.shape_cast %24 : vector<8xf32> to vector<8x1xf32>
      %cst_21 = arith.constant 3.125000e-02 : f32
      %26 = vector.broadcast %cst_21 : f32 to vector<8x1xf32>
      %27 = arith.mulf %25, %26 : vector<8x1xf32>
      %28 = vector.broadcast %27 : vector<8x1xf32> to vector<8x128xf32>
      %29 = arith.subf %23, %28 : vector<8x128xf32>
      %30 = tpu.iota {dimensions = array<i32: 1>} : vector<8x128xi32>
      %c32_i32 = arith.constant 32 : i32
      %31 = vector.broadcast %c32_i32 : i32 to vector<8x128xi32>
      %32 = arith.cmpi slt, %30, %31 : vector<8x128xi32>
      %cst_22 = arith.constant 0.000000e+00 : f32
      %33 = vector.broadcast %cst_22 : f32 to vector<8x128xf32>
      %34 = arith.select %32, %29, %33 : vector<8x128xi1>, vector<8x128xf32>
      %35 = arith.mulf %34, %34 : vector<8x128xf32>
      %cst_23 = arith.constant dense<0.000000e+00> : vector<8xf32>
      %36 = vector.multi_reduction <add>, %35, %cst_23 [1] : vector<8x128xf32> to vector<8xf32>
      %37 = vector.shape_cast %36 : vector<8xf32> to vector<8x1xf32>
      %cst_24 = arith.constant 3.125000e-02 : f32
      %38 = vector.broadcast %cst_24 : f32 to vector<8x1xf32>
      %39 = arith.mulf %37, %38 : vector<8x1xf32>
      %cst_25 = arith.constant 9.99999997E-7 : f32
      %40 = vector.broadcast %cst_25 : f32 to vector<8x1xf32>
      %41 = arith.addf %39, %40 : vector<8x1xf32>
      %42 = math.rsqrt %41 : vector<8x1xf32>
      %43 = vector.broadcast %42 : vector<8x1xf32> to vector<8x128xf32>
      %44 = arith.mulf %34, %43 : vector<8x128xf32>
      %c0_26 = arith.constant 0 : index
      %c0_27 = arith.constant 0 : index
      %45 = vector.load %arg7[%c0_26, %c0_27] : memref<1x128xf32, #tpu.memory_space<vmem>>, vector<1x128xf32>
      %46 = vector.broadcast %45 : vector<1x128xf32> to vector<8x128xf32>
      %47 = arith.mulf %44, %46 : vector<8x128xf32>
      %c0_28 = arith.constant 0 : index
      %c0_29 = arith.constant 0 : index
      %48 = vector.load %arg8[%c0_28, %c0_29] : memref<1x128xf32, #tpu.memory_space<vmem>>, vector<1x128xf32>
      %49 = vector.broadcast %48 : vector<1x128xf32> to vector<8x128xf32>
      %50 = arith.addf %47, %49 : vector<8x128xf32>
      %c0_30 = arith.constant 0 : index
      %c0_31 = arith.constant 0 : index
      %51 = vector.load %arg9[%c0_30, %c0_31] : memref<8x128xf32, #tpu.memory_space<vmem>>, vector<8x128xf32>
      tpu.vector_store %arg9[%c0_30, %c0_31], %50 {strides = array<i32>} : memref<8x128xf32, #tpu.memory_space<vmem>>, vector<8x128xf32>,
    } else {
    }
    return
  }
  func.func @transform_0(%arg0: i32, %arg1: i32) -> (i32, i32) {
    %c0_i32 = arith.constant 0 : i32
    %c0_i32_0 = arith.constant 0 : i32
    return %arg0, %c0_i32 : i32, i32
  }
  func.func @transform_1(%arg0: i32, %arg1: i32) -> (i32, i32) {
    %c0_i32 = arith.constant 0 : i32
    %c0_i32_0 = arith.constant 0 : i32
    return %c0_i32, %arg1 : i32, i32
  }
  func.func @transform_2(%arg0: i32, %arg1: i32) -> (i32, i32) {
    %c0_i32 = arith.constant 0 : i32
    %c0_i32_0 = arith.constant 0 : i32
    return %c0_i32, %arg1 : i32, i32
  }
  func.func @transform_3(%arg0: i32, %arg1: i32) -> (i32, i32) {
    %c0_i32 = arith.constant 0 : i32
    %c0_i32_0 = arith.constant 0 : i32
    return %arg1, %c0_i32 : i32, i32
  }
  func.func @transform_4(%arg0: i32, %arg1: i32) -> (i32, i32) {
    %c0_i32 = arith.constant 0 : i32
    %c0_i32_0 = arith.constant 0 : i32
    %c0_i32_1 = arith.constant 0 : i32
    return %c0_i32, %c0_i32_0 : i32, i32
  }
  func.func @transform_5(%arg0: i32, %arg1: i32) -> (i32, i32) {
    %c0_i32 = arith.constant 0 : i32
    %c0_i32_0 = arith.constant 0 : i32
    %c0_i32_1 = arith.constant 0 : i32
    return %c0_i32, %c0_i32_0 : i32, i32
  }
  func.func @transform_6(%arg0: i32, %arg1: i32) -> (i32, i32) {
    %c0_i32 = arith.constant 0 : i32
    %c0_i32_0 = arith.constant 0 : i32
    %c0_i32_1 = arith.constant 0 : i32
    return %c0_i32, %c0_i32_0 : i32, i32
  }
  func.func @transform_7(%arg0: i32, %arg1: i32) -> (i32, i32) {
    %c0_i32 = arith.constant 0 : i32
    %c0_i32_0 = arith.constant 0 : i32
    return %arg0, %c0_i32 : i32, i32
  }
}

</mosaic_0001>

<llo_original>
// kernel: tpu_custom_call.1
$region0: #{tpu_custom_call.1}
  #allocation0 [shape = 'u32[]', space=smem, size = 0x4, offset = 0x4, fixed_abs, tag = 'smem constant byte address 0x4 - core index']
  #allocation1 [shape = 'u32[72,128]{1,0:T(1,128)}', space=vmem, size = 0x9000, scoped, tag = 'internal scratch']
  #allocation2 [shape = 'f32[8,128]{1,0:T(8,128)}', space=vmem, size = 0x1000, scoped, tag = 'scratch operand']
  %s0 = inlined_call_operand.hbm [shape: f32[16,128], index: 0, kind: input, shape index: {}]
  %s1 = inlined_call_operand.hbm [shape: f32[128,128], index: 1, kind: input, shape index: {}]
  %s2 = inlined_call_operand.vmem [shape: f32[1,128], index: 2, kind: input, shape index: {}]
  %s3 = inlined_call_operand.hbm [shape: f32[128,128], index: 3, kind: input, shape index: {}]
  %s4 = inlined_call_operand.vmem [shape: f32[1,128], index: 4, kind: input, shape index: {}]
  %s5 = inlined_call_operand.vmem [shape: f32[1,128], index: 5, kind: input, shape index: {}]
  %s6 = inlined_call_operand.vmem [shape: f32[1,128], index: 6, kind: input, shape index: {}]
  %s7 = inlined_call_operand.hbm [shape: f32[16,128], index: 7, kind: output, shape index: {}]
  %s8 = sld [smem:[#allocation0]]
  $region81: #{tpu_custom_call.1} parent=0
    _
  %s10 = ssub.s32 1, %s8
  %s11 = scalar_select 0, %s10, %s8
  $region1: #{tpu_custom_call.1} parent=0
    #allocation3 [shape = 'u8[8192]{0}', space=vmem, size = 0x2000, scoped, tag = 'input window, operand 0']
    #allocation4 [shape = 's32[2]{0}', space=sflag, size = 0x8, scoped, tag = 'scoped memory for tpu_custom_call.1']
    #allocation5 [shape = 's32[2]{0}', space=sflag, size = 0x8, scoped, tag = 'scoped memory for tpu_custom_call.1']
    #allocation6 [shape = 'u8[65536]{0}', space=vmem, size = 0x10000, scoped, tag = 'input window, operand 1, single buffered']
    #allocation7 [shape = 's32[1]{0}', space=sflag, size = 0x4, scoped, tag = 'scoped memory for tpu_custom_call.1']
    #allocation8 [shape = 'u8[65536]{0}', space=vmem, size = 0x10000, scoped, tag = 'input window, operand 3, single buffered']
    #allocation9 [shape = 'u8[8192]{0}', space=vmem, size = 0x2000, scoped, tag = 'output window, operand 0']
    %12 = vsyncpa [#allocation4], 0
    %s13 = scalar_lea.sflag [#allocation4], 1
    %14 = vsyncpa %s13, 0
    %15 = vsyncpa [#allocation7], 0
    %16 = vsyncpa [#allocation5], 0
    %s17 = scalar_lea.sflag [#allocation5], 1
    %18 = vsyncpa %s17, 0
    loop: start=0, step=1, limit=4
    $region2: #{tpu_custom_call.1} parent=1 // loop_pre_header
      _
    $region3: #{tpu_custom_call.1} parent=1 // loop_header
      %s20 = sphi 0, %s24
      %p21 = scmp.ge.s32.totalorder %s20, 4
      %s27 = sphi 0, %s39
      %s28 = sphi 0, %s35
      %s29 = sphi 0, %s27
      %s30 = sphi 0, %s28
      %s31 = sphi 0, %s29
      %s32 = sphi 0, %s30
      %s42 = sphi 0, %s44
      %s45 = sphi 0, %s42
      %s46 = sphi 0, %s45
      %s62 = sphi 0, %s46
      %s68 = sphi 0, %s70
      %s71 = sphi 0, %s68
      %s72 = sphi 0, %s71
      %s88 = sphi 0, %s72
      %s94 = sphi 0, %s96
      %s97 = sphi 0, %s94
      %s98 = sphi 0, %s97
      %s114 = sphi 0, %s98
      %s120 = sphi 0, %s122
      %s123 = sphi 0, %s120
      %s124 = sphi 0, %s123
      %s140 = sphi 0, %s124
      %s144 = sphi 0, %s144
      %s146 = sphi 0, %s144
      %s147 = sphi 0, %s146
      %s161 = sphi 0, %s147
      %s165 = sphi 0, %s165
      %s167 = sphi 0, %s165
      %s168 = sphi 0, %s167
      %s182 = sphi 0, %s168
      %s186 = sphi 0, %s186
      %s188 = sphi 0, %s186
      %s189 = sphi 0, %s188
      %s203 = sphi 0, %s189
      %s209 = sphi 0, %s211
      %s212 = sphi 0, %s209
      %s213 = sphi 0, %s212
      %s229 = sphi 0, %s213
    $region4: #{tpu_custom_call.1} parent=1 // loop_header_branch
      %23 = sbr.rel (%p21) target = $region8
    $region5: #{tpu_custom_call.1} parent=1 // loop_body
      %s25 = ssub.s32 %s20, 1
      %s26 = ssub.s32 %s20, 2
      %s33 = sadd.s32 1, %s28
      %p34 = scmp.ge.s32.totalorder %s33, 1
      %s35 = scalar_select %p34, 0, %s33
      %s36 = sadd.s32 1, %s27
      %s37 = scalar_select %p34, %s36, %s27
      %p38 = scmp.ge.s32.totalorder %s37, 2
      %s39 = scalar_select %p38, 0, %s37
      %s40 = ssub.s32 %s27, %s39
      %p41 = scmp.eq.s32.totalorder %s40, 0
      %s43 = sadd.s32 %s42, 1
      %s44 = scalar_select %p41, %s42, %s43
      %p47 = pneg %p41
      %p48 = scmp.eq.s32.totalorder %s20, 1
      %p49 = por %p47, %p48
      %p50 = scmp.ne.s32.totalorder %s42, %s45
      %p51 = scmp.eq.s32.totalorder %s20, 0
      %p52 = por %p50, %p51
      %p53 = scmp.ne.s32.totalorder %s42, %s45
      %p54 = scmp.eq.s32.totalorder %s25, 1
      %p55 = por %p53, %p54
      %p56 = scmp.ne.s32.totalorder %s45, %s46
      %p57 = scmp.eq.s32.totalorder %s25, 0
      %p58 = por %p56, %p57
      %p59 = scmp.ne.s32.totalorder %s45, %s46
      %p60 = scmp.eq.s32.totalorder %s26, 1
      %p61 = por %p59, %p60
      %p63 = scmp.ne.s32.totalorder %s46, %s62
      %p64 = scmp.eq.s32.totalorder %s26, 0
      %p65 = por %p63, %p64
      %s66 = ssub.s32 %s28, %s35
      %p67 = scmp.eq.s32.totalorder %s66, 0
      %s69 = sadd.s32 %s68, 1
      %s70 = scalar_select %p67, %s68, %s69
      %p73 = pneg %p67
      %p74 = scmp.eq.s32.totalorder %s20, 1
      %p75 = por %p73, %p74
      %p76 = scmp.ne.s32.totalorder %s68, %s71
      %p77 = scmp.eq.s32.totalorder %s20, 0
      %p78 = por %p76, %p77
      %p79 = scmp.ne.s32.totalorder %s68, %s71
      %p80 = scmp.eq.s32.totalorder %s25, 1
      %p81 = por %p79, %p80
      %p82 = scmp.ne.s32.totalorder %s71, %s72
      %p83 = scmp.eq.s32.totalorder %s25, 0
      %p84 = por %p82, %p83
      %p85 = scmp.ne.s32.totalorder %s71, %s72
      %p86 = scmp.eq.s32.totalorder %s26, 1
      %p87 = por %p85, %p86
      %p89 = scmp.ne.s32.totalorder %s72, %s88
      %p90 = scmp.eq.s32.totalorder %s26, 0
      %p91 = por %p89, %p90
      %s92 = ssub.s32 %s28, %s35
      %p93 = scmp.eq.s32.totalorder %s92, 0
      %s95 = sadd.s32 %s94, 1
      %s96 = scalar_select %p93, %s94, %s95
      %p99 = pneg %p93
      %p100 = scmp.eq.s32.totalorder %s20, 1
      %p101 = por %p99, %p100
      %p102 = scmp.ne.s32.totalorder %s94, %s97
      %p103 = scmp.eq.s32.totalorder %s20, 0
      %p104 = por %p102, %p103
      %p105 = scmp.ne.s32.totalorder %s94, %s97
      %p106 = scmp.eq.s32.totalorder %s25, 1
      %p107 = por %p105, %p106
      %p108 = scmp.ne.s32.totalorder %s97, %s98
      %p109 = scmp.eq.s32.totalorder %s25, 0
      %p110 = por %p108, %p109
      %p111 = scmp.ne.s32.totalorder %s97, %s98
      %p112 = scmp.eq.s32.totalorder %s26, 1
      %p113 = por %p111, %p112
      %p115 = scmp.ne.s32.totalorder %s98, %s114
      %p116 = scmp.eq.s32.totalorder %s26, 0
      %p117 = por %p115, %p116
      %s118 = ssub.s32 %s28, %s35
      %p119 = scmp.eq.s32.totalorder %s118, 0
      %s121 = sadd.s32 %s120, 1
      %s122 = scalar_select %p119, %s120, %s121
      %p125 = pneg %p119
      %p126 = scmp.eq.s32.totalorder %s20, 1
      %p127 = por %p125, %p126
      %p128 = scmp.ne.s32.totalorder %s120, %s123
      %p129 = scmp.eq.s32.totalorder %s20, 0
      %p130 = por %p128, %p129
      %p131 = scmp.ne.s32.totalorder %s120, %s123
      %p132 = scmp.eq.s32.totalorder %s25, 1
      %p133 = por %p131, %p132
      %p134 = scmp.ne.s32.totalorder %s123, %s124
      %p135 = scmp.eq.s32.totalorder %s25, 0
      %p136 = por %p134, %p135
      %p137 = scmp.ne.s32.totalorder %s123, %s124
      %p138 = scmp.eq.s32.totalorder %s26, 1
      %p139 = por %p137, %p138
      %p141 = scmp.ne.s32.totalorder %s124, %s140
      %p142 = scmp.eq.s32.totalorder %s26, 0
      %p143 = por %p141, %p142
      %s145 = sadd.s32 %s144, 1
      %p148 = scmp.eq.s32.totalorder %s20, 1
      %p149 = scmp.ne.s32.totalorder %s144, %s146
      %p150 = scmp.eq.s32.totalorder %s20, 0
      %p151 = por %p149, %p150
      %p152 = scmp.ne.s32.totalorder %s144, %s146
      %p153 = scmp.eq.s32.totalorder %s25, 1
      %p154 = por %p152, %p153
      %p155 = scmp.ne.s32.totalorder %s146, %s147
      %p156 = scmp.eq.s32.totalorder %s25, 0
      %p157 = por %p155, %p156
      %p158 = scmp.ne.s32.totalorder %s146, %s147
      %p159 = scmp.eq.s32.totalorder %s26, 1
      %p160 = por %p158, %p159
      %p162 = scmp.ne.s32.totalorder %s147, %s161
      %p163 = scmp.eq.s32.totalorder %s26, 0
      %p164 = por %p162, %p163
      %s166 = sadd.s32 %s165, 1
      %p169 = scmp.eq.s32.totalorder %s20, 1
      %p170 = scmp.ne.s32.totalorder %s165, %s167
      %p171 = scmp.eq.s32.totalorder %s20, 0
      %p172 = por %p170, %p171
      %p173 = scmp.ne.s32.totalorder %s165, %s167
      %p174 = scmp.eq.s32.totalorder %s25, 1
      %p175 = por %p173, %p174
      %p176 = scmp.ne.s32.totalorder %s167, %s168
      %p177 = scmp.eq.s32.totalorder %s25, 0
      %p178 = por %p176, %p177
      %p179 = scmp.ne.s32.totalorder %s167, %s168
      %p180 = scmp.eq.s32.totalorder %s26, 1
      %p181 = por %p179, %p180
      %p183 = scmp.ne.s32.totalorder %s168, %s182
      %p184 = scmp.eq.s32.totalorder %s26, 0
      %p185 = por %p183, %p184
      %s187 = sadd.s32 %s186, 1
      %p190 = scmp.eq.s32.totalorder %s20, 1
      %p191 = scmp.ne.s32.totalorder %s186, %s188
      %p192 = scmp.eq.s32.totalorder %s20, 0
      %p193 = por %p191, %p192
      %p194 = scmp.ne.s32.totalorder %s186, %s188
      %p195 = scmp.eq.s32.totalorder %s25, 1
      %p196 = por %p194, %p195
      %p197 = scmp.ne.s32.totalorder %s188, %s189
      %p198 = scmp.eq.s32.totalorder %s25, 0
      %p199 = por %p197, %p198
      %p200 = scmp.ne.s32.totalorder %s188, %s189
      %p201 = scmp.eq.s32.totalorder %s26, 1
      %p202 = por %p200, %p201
      %p204 = scmp.ne.s32.totalorder %s189, %s203
      %p205 = scmp.eq.s32.totalorder %s26, 0
      %p206 = por %p204, %p205
      %s207 = ssub.s32 %s27, %s39
      %p208 = scmp.eq.s32.totalorder %s207, 0
      %s210 = sadd.s32 %s209, 1
      %s211 = scalar_select %p208, %s209, %s210
      %p214 = pneg %p208
      %p215 = scmp.eq.s32.totalorder %s20, 1
      %p216 = por %p214, %p215
      %p217 = scmp.ne.s32.totalorder %s209, %s212
      %p218 = scmp.eq.s32.totalorder %s20, 0
      %p219 = por %p217, %p218
      %p220 = scmp.ne.s32.totalorder %s209, %s212
      %p221 = scmp.eq.s32.totalorder %s25, 1
      %p222 = por %p220, %p221
      %p223 = scmp.ne.s32.totalorder %s212, %s213
      %p224 = scmp.eq.s32.totalorder %s25, 0
      %p225 = por %p223, %p224
      %p226 = scmp.ne.s32.totalorder %s212, %s213
      %p227 = scmp.eq.s32.totalorder %s26, 1
      %p228 = por %p226, %p227
      %p230 = scmp.ne.s32.totalorder %s213, %s229
      %p231 = scmp.eq.s32.totalorder %s26, 0
      %p232 = por %p230, %p231
      %p233 = scmp.le.s32.totalorder 1, %s20
      %p234 = scmp.lt.s32.totalorder %s20, 3
      %p235 = pnand %p233, %p234
      %p236 = pneg %p235
      // Predicated region
      $region9: #{tpu_custom_call.1} parent=5 // pred_check
        _
      $region10: #{tpu_custom_call.1} parent=5 // pred_check_branch
        %238 = sbr.rel (%p235) target = $region12
      $region11: #{tpu_custom_call.1} parent=5 // pred_region
        %s239 = ssub.s32 %s20, 1
        // Predicated region
        $region13: #{tpu_custom_call.1} parent=11 // pred_check
          %p240 = pneg %p84
        $region14: #{tpu_custom_call.1} parent=11 // pred_check_branch
          %242 = sbr.rel (%p240) target = $region16
        $region15: #{tpu_custom_call.1} parent=11 // pred_region
          %244 = vsyncadd [#allocation7], 0
          %s245 = smul.addr %s30, 8
          %s246 = scalar_lea.hbm %s1, %s245
          %s247 = sshll.u32 %s246, 4
          %s248 = int_to_ptr.hbm [resolvable:$true] %s247
          %s249 = sshll.u32 [#allocation6], 4
          %s250 = int_to_ptr.vmem [resolvable:$true] %s249
          %255 = dma.hbm_to_vmem [thread:$0]  %s248, 2048, %s250, [#allocation7], 128, 128, 8
        $region16: #{tpu_custom_call.1} parent=11 // pred_fallthru
          _
        // Predicated region
        $region17: #{tpu_custom_call.1} parent=11 // pred_check
          %p256 = pneg %p110
        $region18: #{tpu_custom_call.1} parent=11 // pred_check_branch
          %258 = sbr.rel (%p256) target = $region20
        $region19: #{tpu_custom_call.1} parent=11 // pred_region
          %p259 = scmp.lt.s32.totalorder %s30, 0
          %s260 = scalar_select %p259, %s30, 0
          %s261 = scalar_lea.vmem %s2, %s260
        $region20: #{tpu_custom_call.1} parent=11 // pred_fallthru
          _
        // Predicated region
        $region21: #{tpu_custom_call.1} parent=11 // pred_check
          %p262 = pneg %p136
        $region22: #{tpu_custom_call.1} parent=11 // pred_check_branch
          %264 = sbr.rel (%p262) target = $region24
        $region23: #{tpu_custom_call.1} parent=11 // pred_region
          %s265 = smul.u32 16, %s30
          %267 = vsyncadd [#allocation7], 0
          %s268 = smul.addr %s265, 8
          %s269 = scalar_lea.hbm %s3, %s268
          %s270 = sshll.u32 %s269, 4
          %s271 = int_to_ptr.hbm [resolvable:$true] %s270
          %s272 = sshll.u32 [#allocation8], 4
          %s273 = int_to_ptr.vmem [resolvable:$true] %s272
          %278 = dma.hbm_to_vmem [thread:$0]  %s271, 2048, %s273, [#allocation7], 128, 128, 8
        $region24: #{tpu_custom_call.1} parent=11 // pred_fallthru
          _
        // Predicated region
        $region25: #{tpu_custom_call.1} parent=11 // pred_check
          %p279 = pneg %p157
        $region26: #{tpu_custom_call.1} parent=11 // pred_check_branch
          %281 = sbr.rel (%p279) target = $region28
        $region27: #{tpu_custom_call.1} parent=11 // pred_region
          _
        $region28: #{tpu_custom_call.1} parent=11 // pred_fallthru
          _
        // Predicated region
        $region29: #{tpu_custom_call.1} parent=11 // pred_check
          %p282 = pneg %p178
        $region30: #{tpu_custom_call.1} parent=11 // pred_check_branch
          %284 = sbr.rel (%p282) target = $region32
        $region31: #{tpu_custom_call.1} parent=11 // pred_region
          _
        $region32: #{tpu_custom_call.1} parent=11 // pred_fallthru
          _
        // Predicated region
        $region33: #{tpu_custom_call.1} parent=11 // pred_check
          %p285 = pneg %p199
        $region34: #{tpu_custom_call.1} parent=11 // pred_check_branch
          %287 = sbr.rel (%p285) target = $region36
        $region35: #{tpu_custom_call.1} parent=11 // pred_region
          _
        $region36: #{tpu_custom_call.1} parent=11 // pred_fallthru
          _
      $region12: #{tpu_custom_call.1} parent=5 // pred_fallthru
        _
      %p288 = scmp.lt.s32.totalorder %s20, 2
      // Predicated region
      $region37: #{tpu_custom_call.1} parent=5 // pred_check
        %p289 = pneg %p288
      $region38: #{tpu_custom_call.1} parent=5 // pred_check_branch
        %291 = sbr.rel (%p289) target = $region40
      $region39: #{tpu_custom_call.1} parent=5 // pred_region
        // Predicated region
        $region41: #{tpu_custom_call.1} parent=39 // pred_check
          %p292 = pneg %p52
        $region42: #{tpu_custom_call.1} parent=39 // pred_check_branch
          %294 = sbr.rel (%p292) target = $region44
        $region43: #{tpu_custom_call.1} parent=39 // pred_region
          %s295 = sand.u32 %s42, 1
          %s296 = scalar_lea.sflag [#allocation4], %s295
          %s297 = sand.u32 %s42, 1
          %s298 = smul.addr %s297, 8
          %s299 = scalar_lea.vmem [#allocation3], %s298
          %301 = vsyncadd %s296, 0
          %s302 = smul.addr %s27, 8
          %s303 = scalar_lea.hbm %s0, %s302
          %s305 = sshll.u32 %s303, 4
          %s306 = int_to_ptr.hbm [resolvable:$true] %s305
          %s307 = sshll.u32 %s299, 4
          %s308 = int_to_ptr.vmem [resolvable:$true] %s307
          %310 = dma.hbm_to_vmem [thread:$0]  %s306, 128, %s308, %s296
        $region44: #{tpu_custom_call.1} parent=39 // pred_fallthru
          _
      $region40: #{tpu_custom_call.1} parent=5 // pred_fallthru
        _
      %p311 = scmp.le.s32.totalorder 1, %s20
      %p312 = scmp.lt.s32.totalorder %s20, 3
      %p313 = pnand %p311, %p312
      %p314 = pneg %p313
      // Predicated region
      $region45: #{tpu_custom_call.1} parent=5 // pred_check
        _
      $region46: #{tpu_custom_call.1} parent=5 // pred_check_branch
        %316 = sbr.rel (%p313) target = $region48
      $region47: #{tpu_custom_call.1} parent=5 // pred_region
        %s317 = ssub.s32 %s20, 1
        %s318 = sand.u32 %s45, 1
        %s319 = scalar_lea.sflag [#allocation4], %s318
        %s320 = sand.u32 %s45, 1
        %s321 = smul.addr %s320, 8
        %s322 = scalar_lea.vmem [#allocation3], %s321
        // Predicated region
        $region49: #{tpu_custom_call.1} parent=47 // pred_check
          %p323 = pneg %p58
        $region50: #{tpu_custom_call.1} parent=47 // pred_check_branch
          %325 = sbr.rel (%p323) target = $region52
        $region51: #{tpu_custom_call.1} parent=47 // pred_region
          %327 = dma.done %s319, 128
        $region52: #{tpu_custom_call.1} parent=47 // pred_fallthru
          _
        // Predicated region
        $region53: #{tpu_custom_call.1} parent=47 // pred_check
          %p328 = pneg %p84
        $region54: #{tpu_custom_call.1} parent=47 // pred_check_branch
          %330 = sbr.rel (%p328) target = $region56
        $region55: #{tpu_custom_call.1} parent=47 // pred_region
          %332 = dma.done [#allocation7], 2048
        $region56: #{tpu_custom_call.1} parent=47 // pred_fallthru
          _
        // Predicated region
        $region57: #{tpu_custom_call.1} parent=47 // pred_check
          %p333 = pneg %p136
        $region58: #{tpu_custom_call.1} parent=47 // pred_check_branch
          %335 = sbr.rel (%p333) target = $region60
        $region59: #{tpu_custom_call.1} parent=47 // pred_region
          %337 = dma.done [#allocation7], 2048
        $region60: #{tpu_custom_call.1} parent=47 // pred_fallthru
          _
        %s338 = sand.u32 %s45, 1
        %s339 = scalar_lea.sflag [#allocation4], %s338
        %s340 = sand.u32 %s45, 1
        %s341 = smul.addr %s340, 8
        %s342 = scalar_lea.vmem [#allocation3], %s341
        %p343 = pneg %p58
        %p344 = pneg %p55
        %p345 = pneg %p84
        %p346 = pneg %p81
        %p347 = scmp.lt.s32.totalorder %s30, 0
        %s348 = scalar_select %p347, %s30, 0
        %s349 = scalar_lea.vmem %s2, %s348
        %p350 = pneg %p110
        %p351 = pneg %p107
        %p352 = pneg %p136
        %p353 = pneg %p133
        %p354 = pneg %p157
        %p355 = pneg %p154
        %p356 = pneg %p178
        %p357 = pneg %p175
        %p358 = pneg %p199
        %p359 = pneg %p196
        %p360 = pneg %p225
        %p361 = pneg %p222
        %s362 = sand.u32 %s212, 1
        %s363 = scalar_lea.sflag [#allocation5], %s362
        %s364 = sand.u32 %s212, 1
        %s365 = smul.addr %s364, 8
        %s366 = scalar_lea.vmem [#allocation9], %s365
        %p367 = scmp.lt.s32.totalorder %s30, 0
        %s368 = scalar_select %p367, %s30, 0
        %s369 = scalar_lea.vmem %s2, %s368
        %s370 = smul.u32 16, %s30
        %p371 = scmp.eq.s32.totalorder %s30, 0
        // Predicated region
        $region61: #{tpu_custom_call.1} parent=47 // pred_check
          %p372 = pneg %p371
        $region62: #{tpu_custom_call.1} parent=47 // pred_check_branch
          %374 = sbr.rel (%p372) target = $region64
        $region63: #{tpu_custom_call.1} parent=47 // pred_region
          %375 = vst [vmem:[#allocation2] sm:$0xff] 0.0
        $region64: #{tpu_custom_call.1} parent=47 // pred_fallthru
          _
        %v376 = vld [vmem:[%s322] sm:$0xff]
        %v377 = vld [vmem:[#allocation6] sm:$0xff]
        %v378 = vld [vmem:[#allocation6 + $0x8] sm:$0xff]
        %v379 = vld [vmem:[#allocation6 + $0x10] sm:$0xff]
        %v380 = vld [vmem:[#allocation6 + $0x18] sm:$0xff]
        %v381 = vld [vmem:[#allocation6 + $0x20] sm:$0xff]
        %v382 = vld [vmem:[#allocation6 + $0x28] sm:$0xff]
        %v383 = vld [vmem:[#allocation6 + $0x30] sm:$0xff]
        %v384 = vld [vmem:[#allocation6 + $0x38] sm:$0xff]
        %v385 = vld [vmem:[#allocation6 + $0x40] sm:$0xff]
        %v386 = vld [vmem:[#allocation6 + $0x48] sm:$0xff]
        %v387 = vld [vmem:[#allocation6 + $0x50] sm:$0xff]
        %v388 = vld [vmem:[#allocation6 + $0x58] sm:$0xff]
        %v389 = vld [vmem:[#allocation6 + $0x60] sm:$0xff]
        %v390 = vld [vmem:[#allocation6 + $0x68] sm:$0xff]
        %v391 = vld [vmem:[#allocation6 + $0x70] sm:$0xff]
        %v392 = vld [vmem:[#allocation6 + $0x78] sm:$0xff]
        %v393 = vld [vmem:[%s369] sm:$0x1]
        %v395 = vperm.slane %v393, 0
        %397 = vmatpush.msra.mxu0 %v392
        %398 = vmatpush.msra.mxu0 %v391
        %399 = vmatpush.msra.mxu0 %v390
        %400 = vmatpush.msra.mxu0 %v389
        %401 = vmatpush.msra.mxu0 %v388
        %402 = vmatpush.msra.mxu0 %v387
        %403 = vmatpush.msra.mxu0 %v386
        %404 = vmatpush.msra.mxu0 %v385
        %405 = vmatpush.msra.mxu0 %v384
        %406 = vmatpush.msra.mxu0 %v383
        %407 = vmatpush.msra.mxu0 %v382
        %408 = vmatpush.msra.mxu0 %v381
        %409 = vmatpush.msra.mxu0 %v380
        %410 = vmatpush.msra.mxu0 %v379
        %411 = vmatpush.msra.mxu0 %v378
        %412 = vmatpush.msra.mxu0 %v377
        %413 = vmatmul.f32.gmra.mxu0 %v376
        %v414 = vpop.f32.mrf.mxu0
        %v415 = vadd.f32 %v395, %v414
        %416 = vdwg.mxu0
        %v417 = vmax.f32 %v415, 0.0
        %v418 = vld [vmem:[#allocation2] sm:$0xff]
        %v419 = vld [vmem:[#allocation8] sm:$0xff]
        %v420 = vld [vmem:[#allocation8 + $0x8] sm:$0xff]
        %v421 = vld [vmem:[#allocation8 + $0x10] sm:$0xff]
        %v422 = vld [vmem:[#allocation8 + $0x18] sm:$0xff]
        %v423 = vld [vmem:[#allocation8 + $0x20] sm:$0xff]
        %v424 = vld [vmem:[#allocation8 + $0x28] sm:$0xff]
        %v425 = vld [vmem:[#allocation8 + $0x30] sm:$0xff]
        %v426 = vld [vmem:[#allocation8 + $0x38] sm:$0xff]
        %v427 = vld [vmem:[#allocation8 + $0x40] sm:$0xff]
        %v428 = vld [vmem:[#allocation8 + $0x48] sm:$0xff]
        %v429 = vld [vmem:[#allocation8 + $0x50] sm:$0xff]
        %v430 = vld [vmem:[#allocation8 + $0x58] sm:$0xff]
        %v431 = vld [vmem:[#allocation8 + $0x60] sm:$0xff]
        %v432 = vld [vmem:[#allocation8 + $0x68] sm:$0xff]
        %v433 = vld [vmem:[#allocation8 + $0x70] sm:$0xff]
        %v434 = vld [vmem:[#allocation8 + $0x78] sm:$0xff]
        %435 = vmatpush.msra.mxu0 %v434
        %436 = vmatpush.msra.mxu0 %v433
        %437 = vmatpush.msra.mxu0 %v432
        %438 = vmatpush.msra.mxu0 %v431
        %439 = vmatpush.msra.mxu0 %v430
        %440 = vmatpush.msra.mxu0 %v429
        %441 = vmatpush.msra.mxu0 %v428
        %442 = vmatpush.msra.mxu0 %v427
        %443 = vmatpush.msra.mxu0 %v426
        %444 = vmatpush.msra.mxu0 %v425
        %445 = vmatpush.msra.mxu0 %v424
        %446 = vmatpush.msra.mxu0 %v423
        %447 = vmatpush.msra.mxu0 %v422
        %448 = vmatpush.msra.mxu0 %v421
        %449 = vmatpush.msra.mxu0 %v420
        %450 = vmatpush.msra.mxu0 %v419
        %451 = vmatmul.f32.gmra.mxu0 %v417
        %v452 = vpop.f32.mrf.mxu0
        %v453 = vadd.f32 0.0, %v452
        %454 = vdwg.mxu0
        %v455 = vadd.f32 %v418, %v453
        %456 = vst [vmem:[#allocation2] sm:$0xff] %v455
        // Predicated region
        $region65: #{tpu_custom_call.1} parent=47 // pred_check
          %p457 = pneg %p371
        $region66: #{tpu_custom_call.1} parent=47 // pred_check_branch
          %459 = sbr.rel (%p457) target = $region68
        $region67: #{tpu_custom_call.1} parent=47 // pred_region
          %v460 = vld [vmem:[#allocation2] sm:$0xff]
          %v461 = vld [vmem:[%s4] sm:$0x1]
          %v463 = vperm.slane %v461, 0
          %v465 = vadd.f32 %v460, %v463
          %v466 = vadd.f32 %v465, %v376
          %467 = vadd.xlane.f32.xlu0 %v466
          %v468 = vpop.xlane.xlu0 %467
          %v469 = vmul.f32 %v468, 0.03125
          %v470 = vsub.f32 %v466, %v469
          %v471 = vlaneseq
          %v472 = vand.u32 %v471, 127
          %vm473 = vcmp.lt.s32.totalorder %v472, 32
          %v474 = vsel %vm473, %v470, 0.0
          %v475 = vmul.f32 %v474, %v474
          %476 = vadd.xlane.f32.xlu0 %v475
          %v477 = vpop.xlane.xlu0 %476
          %v478 = vmul.f32 %v477, 0.03125
          %v479 = vadd.f32 %v478, 1e-06
          %v480 = vrsqrt.pop %v479
          %v481 = vmul.f32 %v480, %v479
          %v482 = vmul.f32 %v481, %v480
          %v483 = vmul.f32 0.5, %v482
          %v484 = vsub.f32 1.5, %v483
          %v485 = vmul.f32 %v480, %v484
          %vm486 = vweird.f32 %v479
          %vm487 = vweird.f32 %v480
          %vm488 = vmor %vm486, %vm487
          %v489 = vsel %vm488, %v480, %v485
          %v490 = vmul.f32 %v474, %v489
          %v491 = vld [vmem:[%s5] sm:$0x1]
          %v493 = vperm.slane %v491, 0
          %v495 = vmul.f32 %v490, %v493
          %v496 = vld [vmem:[%s6] sm:$0x1]
          %v498 = vperm.slane %v496, 0
          %v500 = vadd.f32 %v495, %v498
          %501 = vst [vmem:[%s366] sm:$0xff] %v500
        $region68: #{tpu_custom_call.1} parent=47 // pred_fallthru
          _
        %s502 = sand.u32 %s212, 1
        %s503 = scalar_lea.sflag [#allocation5], %s502
        %s504 = sand.u32 %s212, 1
        %s505 = smul.addr %s504, 8
        %s506 = scalar_lea.vmem [#allocation9], %s505
        // Predicated region
        $region69: #{tpu_custom_call.1} parent=47 // pred_check
          %p507 = pneg %p222
        $region70: #{tpu_custom_call.1} parent=47 // pred_check_branch
          %509 = sbr.rel (%p507) target = $region72
        $region71: #{tpu_custom_call.1} parent=47 // pred_region
          %511 = vsyncadd %s503, 0
          %s512 = smul.addr %s29, 8
          %s513 = scalar_lea.hbm %s7, %s512
          %s515 = sshll.u32 %s506, 4
          %s516 = int_to_ptr.vmem [resolvable:$true] %s515
          %s517 = sshll.u32 %s513, 4
          %s518 = int_to_ptr.hbm [resolvable:$true] %s517
          %520 = dma.vmem_to_hbm [thread:$0]  %s516, 128, %s518, %s503
        $region72: #{tpu_custom_call.1} parent=47 // pred_fallthru
          _
      $region48: #{tpu_custom_call.1} parent=5 // pred_fallthru
        _
      %p521 = scmp.le.s32.totalorder 2, %s20
      // Predicated region
      $region73: #{tpu_custom_call.1} parent=5 // pred_check
        %p522 = pneg %p521
      $region74: #{tpu_custom_call.1} parent=5 // pred_check_branch
        %524 = sbr.rel (%p522) target = $region76
      $region75: #{tpu_custom_call.1} parent=5 // pred_region
        %s525 = ssub.s32 %s20, 2
        // Predicated region
        $region77: #{tpu_custom_call.1} parent=75 // pred_check
          %p526 = pneg %p228
        $region78: #{tpu_custom_call.1} parent=75 // pred_check_branch
          %528 = sbr.rel (%p526) target = $region80
        $region79: #{tpu_custom_call.1} parent=75 // pred_region
          %s529 = sand.u32 %s213, 1
          %s530 = scalar_lea.sflag [#allocation5], %s529
          %s531 = sand.u32 %s213, 1
          %s532 = smul.addr %s531, 8
          %s533 = scalar_lea.vmem [#allocation9], %s532
          %535 = dma.done %s530, 128
        $region80: #{tpu_custom_call.1} parent=75 // pred_fallthru
          _
      $region76: #{tpu_custom_call.1} parent=5 // pred_fallthru
        _
    $region6: #{tpu_custom_call.1} parent=1 // loop_footer
      %s24 = sadd.s32 1, %s20
    $region7: #{tpu_custom_call.1} parent=1 // loop_footer_branch
      %19 = sbr.rel target = $region3
    $region8: #{tpu_custom_call.1} parent=1 // loop_exit
      _
    %536 = vsyncpa [#allocation4], 1
    %s537 = scalar_lea.sflag [#allocation4], 1
    %538 = vsyncpa %s537, 1
    %539 = vsyncpa [#allocation7], 1
    %540 = vsyncpa [#allocation5], 1
    %s541 = scalar_lea.sflag [#allocation5], 1
    %542 = vsyncpa %s541, 1

</llo_original>
